<compile_context>
chip_gen: v6e
topology: v6e:2x2x1
jax: 0.10.0
libtpu: 0.0.40
codegen_flags: <defaults>
</compile_context>

<pallas_src>
import jax
import jax.numpy as jnp
from jax.experimental import pallas as pl
from jax.experimental.pallas import tpu as pltpu

S, B, C = 7, 2, 10
D = 5 + C                      # 15 values per box
F_PAD = 16                     # feature axis padded to a sublane multiple
LAMBDA_COORD = 5.0
LAMBDA_NOOBJ = 0.5


def _cdiv(a, b):
    return -(-a // b)


def yolo_loss_kernel(pred_ref, targ_ref, out_ref, acc_loss, acc_ce, acc_cnt):
    # pred_ref / targ_ref: (16, Rb) f32 tiles, features on sublanes,
    # rows on lanes.  Zero-padded rows/features are inert.
    i = pl.program_id(1)

    @pl.when(i == 0)
    def _():
        acc_loss[...] = jnp.zeros_like(acc_loss)
        acc_ce[...] = jnp.zeros_like(acc_ce)
        acc_cnt[...] = jnp.zeros_like(acc_cnt)

    p = pred_ref[...]
    t = targ_ref[...]

    t_conf = t[4:5, :]                               # (1, Rb)
    p_conf = p[4:5, :]                               # (1, Rb)
    obj = (t_conf > 0.0).astype(jnp.float32)         # (1, Rb)
    noobj = 1.0 - obj

    # Fused coord + confidence terms: one per-row expression, one accumulator.
    d = t[0:5, :] - p[0:5, :]                        # (5, Rb)
    sq = d * d
    coord = jnp.sum(sq[0:4, :], axis=0, keepdims=True)   # (1, Rb)
    row_loss = ((LAMBDA_COORD * coord + sq[4:5, :]) * obj
                + LAMBDA_NOOBJ * (p_conf * p_conf) * noobj)

    # Soft-label cross entropy over the C class logits (sublanes 5..14),
    # reductions are cheap sublane reductions.
    logits = p[5:5 + C, :]                           # (C, Rb)
    m = jnp.max(logits, axis=0, keepdims=True)
    lse = jnp.log(jnp.sum(jnp.exp(logits - m), axis=0, keepdims=True)) + m
    ce_row = -jnp.sum(t[5:5 + C, :] * (logits - lse), axis=0, keepdims=True)

    # Per-lane accumulation: only VPU adds per step; the cross-lane reduce is
    # deferred to the single finalize step below.
    acc_loss[...] += row_loss
    acc_ce[...] += ce_row * obj
    acc_cnt[...] += obj

    @pl.when(i == pl.num_programs(1) - 1)
    def _():
        lane = jax.lax.broadcasted_iota(jnp.int32, (1, 1, 128), 2)
        loss_sum = jnp.sum(acc_loss[...])
        ce_sum = jnp.sum(acc_ce[...])
        cnt = jnp.sum(acc_cnt[...])
        out_ref[...] = jnp.where(
            lane == 0, loss_sum,
            jnp.where(lane == 1, ce_sum,
                      jnp.where(lane == 2, cnt, 0.0)))


def yolo_loss(predictions, target, *, row_tile=2048, n_outer=2):
    """predictions, target: (N, S, S, >= B*(5+C)) arrays -> scalar loss."""
    pred = predictions[..., :B * D].reshape(-1, D).astype(jnp.float32)
    targ = target[..., :B * D].reshape(-1, D).astype(jnp.float32)
    r = pred.shape[0]

    rb = min(row_tile, _cdiv(r, 128) * 128)     # lane tile, multiple of 128
    n_tiles = _cdiv(r, rb)
    n_out = max(1, min(n_outer, n_tiles))       # outer (parallel) grid axis
    n_inner = _cdiv(n_tiles, n_out)
    r_pad = n_out * n_inner * rb

    # Lane-dense layout: features -> sublanes (15 -> 16), rows -> lanes.
    # Zero padding is inert: conf==0 => noobj, pred==0 contributes 0,
    # t_cls==0 zeroes the CE term.  (Transpose+pad fuse into one XLA pass.)
    pred_t = jnp.pad(pred.T, ((0, F_PAD - D), (0, r_pad - r)))
    targ_t = jnp.pad(targ.T, ((0, F_PAD - D), (0, r_pad - r)))

    partials = pl.pallas_call(
        yolo_loss_kernel,
        out_shape=jax.ShapeDtypeStruct((n_out, 1, 128), jnp.float32),
        grid_spec=pl.GridSpec(
            grid=(n_out, n_inner),
            in_specs=[
                pl.BlockSpec((F_PAD, rb), lambda o, i: (0, o * n_inner + i)),
                pl.BlockSpec((F_PAD, rb), lambda o, i: (0, o * n_inner + i)),
            ],
            out_specs=pl.BlockSpec((1, 1, 128), lambda o, i: (o, 0, 0)),
            scratch_shapes=[
                pltpu.VMEM((1, rb), jnp.float32),   # fused coord/conf loss
                pltpu.VMEM((1, rb), jnp.float32),   # masked CE
                pltpu.VMEM((1, rb), jnp.float32),   # obj count
            ],
        ),
        compiler_params=pltpu.CompilerParams(
            dimension_semantics=("parallel", "arbitrary")),
    )(pred_t, targ_t)

    loss_sum = jnp.sum(partials[:, 0, 0])
    ce_sum = jnp.sum(partials[:, 0, 1])
    obj_cnt = jnp.sum(partials[:, 0, 2])
    # NaN if there are no object cells, same as torch on an empty selection.
    return loss_sum + ce_sum / obj_cnt


def _reference_loss(predictions, target):
    # pure-JAX reference matching the PyTorch forward
    pb = predictions[..., :B * D].reshape(-1, S, S, B, D)
    tb = target[..., :B * D].reshape(-1, S, S, B, D)
    obj = tb[..., 4] > 0
    noobj = ~obj
    coord = LAMBDA_COORD * jnp.sum(
        (tb[..., :4] - pb[..., :4]) ** 2 * obj[..., None])
    obj_conf = jnp.sum((tb[..., 4] - pb[..., 4]) ** 2 * obj)
    noobj_conf = LAMBDA_NOOBJ * jnp.sum(pb[..., 4] ** 2 * noobj)
    logp = jax.nn.log_softmax(pb[..., 5:], axis=-1)
    ce = -jnp.sum(tb[..., 5:] * logp, axis=-1)
    cls = jnp.sum(ce * obj) / jnp.sum(obj)
    return coord + obj_conf + noobj_conf + cls


if __name__ == "__main__":
    key = jax.random.PRNGKey(0)
    k1, k2 = jax.random.split(key)
    N = 2
    predictions = jax.random.normal(k1, (N, S, S, B * D), dtype=jnp.float32)
    # target: normal values -> roughly half of the confidences are > 0
    target = jax.random.normal(k2, (N, S, S, B * D), dtype=jnp.float32)

    loss = yolo_loss(predictions, target)
    jax.block_until_ready(loss)

    ref = _reference_loss(predictions, target)
    assert jnp.allclose(loss, ref, rtol=1e-5, atol=1e-5), (loss, ref)

    print("KERNEL_OK")
</pallas_src>

<mosaic_0001>
module attributes {stable_mosaic.version = 11 : i64} {
  func.func @yolo_loss_kernel(%arg0: i32, %arg1: i32, %arg2: memref<16x256xf32, #tpu.memory_space<vmem>>, %arg3: memref<16x256xf32, #tpu.memory_space<vmem>>, %arg4: memref<1x1x128xf32, #tpu.memory_space<vmem>>, %arg5: memref<1x256xf32, #tpu.memory_space<vmem>>, %arg6: memref<1x256xf32, #tpu.memory_space<vmem>>, %arg7: memref<1x256xf32, #tpu.memory_space<vmem>>) attributes {dimension_semantics = [#tpu.dimension_semantics<parallel>, #tpu.dimension_semantics<arbitrary>], iteration_bounds = array<i64: 1, 1>, scalar_prefetch = 0 : i64, scratch_operands = 3 : i64, tpu.core_type = #tpu.core_type<tc>, window_params = [{transform_indices = @transform_0, window_bounds = array<i64: 16, 256>}, {transform_indices = @transform_1, window_bounds = array<i64: 16, 256>}, {transform_indices = @transform_2, window_bounds = array<i64: 1, 1, 128>}]} {
    %c0_i32 = arith.constant 0 : i32
    %0 = arith.cmpi eq, %arg1, %c0_i32 : i32
    %1 = arith.extui %0 : i1 to i32
    %c0_i32_0 = arith.constant 0 : i32
    %2 = arith.cmpi ne, %1, %c0_i32_0 : i32
    scf.if %2 {
      %cst_26 = arith.constant 0.000000e+00 : f32
      %61 = vector.broadcast %cst_26 : f32 to vector<1x256xf32>
      %c0_27 = arith.constant 0 : index
      %c0_28 = arith.constant 0 : index
      %62 = vector.load %arg5[%c0_27, %c0_28] : memref<1x256xf32, #tpu.memory_space<vmem>>, vector<1x256xf32>
      tpu.vector_store %arg5[%c0_27, %c0_28], %61 {strides = array<i32>} : memref<1x256xf32, #tpu.memory_space<vmem>>, vector<1x256xf32>,
      %cst_29 = arith.constant 0.000000e+00 : f32
      %63 = vector.broadcast %cst_29 : f32 to vector<1x256xf32>
      %c0_30 = arith.constant 0 : index
      %c0_31 = arith.constant 0 : index
      %64 = vector.load %arg6[%c0_30, %c0_31] : memref<1x256xf32, #tpu.memory_space<vmem>>, vector<1x256xf32>
      tpu.vector_store %arg6[%c0_30, %c0_31], %63 {strides = array<i32>} : memref<1x256xf32, #tpu.memory_space<vmem>>, vector<1x256xf32>,
      %cst_32 = arith.constant 0.000000e+00 : f32
      %65 = vector.broadcast %cst_32 : f32 to vector<1x256xf32>
      %c0_33 = arith.constant 0 : index
      %c0_34 = arith.constant 0 : index
      %66 = vector.load %arg7[%c0_33, %c0_34] : memref<1x256xf32, #tpu.memory_space<vmem>>, vector<1x256xf32>
      tpu.vector_store %arg7[%c0_33, %c0_34], %65 {strides = array<i32>} : memref<1x256xf32, #tpu.memory_space<vmem>>, vector<1x256xf32>,
    } else {
    }
    %c0 = arith.constant 0 : index
    %c0_1 = arith.constant 0 : index
    %3 = vector.load %arg2[%c0, %c0_1] : memref<16x256xf32, #tpu.memory_space<vmem>>, vector<16x256xf32>
    %c0_2 = arith.constant 0 : index
    %c0_3 = arith.constant 0 : index
    %4 = vector.load %arg3[%c0_2, %c0_3] : memref<16x256xf32, #tpu.memory_space<vmem>>, vector<16x256xf32>
    %5 = vector.extract_strided_slice %4 {offsets = [4, 0], sizes = [1, 256], strides = [1, 1]} : vector<16x256xf32> to vector<1x256xf32>
    %6 = vector.extract_strided_slice %3 {offsets = [4, 0], sizes = [1, 256], strides = [1, 1]} : vector<16x256xf32> to vector<1x256xf32>
    %cst = arith.constant 0.000000e+00 : f32
    %7 = vector.broadcast %cst : f32 to vector<1x256xf32>
    %8 = arith.cmpf ogt, %5, %7 : vector<1x256xf32>
    %9 = arith.extui %8 : vector<1x256xi1> to vector<1x256xi32>
    %10 = arith.sitofp %9 : vector<1x256xi32> to vector<1x256xf32>
    %cst_4 = arith.constant 1.000000e+00 : f32
    %11 = vector.broadcast %cst_4 : f32 to vector<1x256xf32>
    %12 = arith.subf %11, %10 : vector<1x256xf32>
    %13 = vector.extract_strided_slice %4 {offsets = [0, 0], sizes = [5, 256], strides = [1, 1]} : vector<16x256xf32> to vector<5x256xf32>
    %14 = vector.extract_strided_slice %3 {offsets = [0, 0], sizes = [5, 256], strides = [1, 1]} : vector<16x256xf32> to vector<5x256xf32>
    %15 = arith.subf %13, %14 : vector<5x256xf32>
    %16 = arith.mulf %15, %15 : vector<5x256xf32>
    %17 = vector.extract_strided_slice %16 {offsets = [0, 0], sizes = [4, 256], strides = [1, 1]} : vector<5x256xf32> to vector<4x256xf32>
    %cst_5 = arith.constant dense<0.000000e+00> : vector<256xf32>
    %18 = vector.multi_reduction <add>, %17, %cst_5 [0] : vector<4x256xf32> to vector<256xf32>
    %19 = vector.shape_cast %18 : vector<256xf32> to vector<1x256xf32>
    %cst_6 = arith.constant 5.000000e+00 : f32
    %20 = vector.broadcast %cst_6 : f32 to vector<1x256xf32>
    %21 = arith.mulf %20, %19 : vector<1x256xf32>
    %22 = vector.extract_strided_slice %16 {offsets = [4, 0], sizes = [1, 256], strides = [1, 1]} : vector<5x256xf32> to vector<1x256xf32>
    %23 = arith.addf %21, %22 : vector<1x256xf32>
    %24 = arith.mulf %23, %10 : vector<1x256xf32>
    %25 = arith.mulf %6, %6 : vector<1x256xf32>
    %cst_7 = arith.constant 5.000000e-01 : f32
    %26 = vector.broadcast %cst_7 : f32 to vector<1x256xf32>
    %27 = arith.mulf %26, %25 : vector<1x256xf32>
    %28 = arith.mulf %27, %12 : vector<1x256xf32>
    %29 = arith.addf %24, %28 : vector<1x256xf32>
    %30 = vector.extract_strided_slice %3 {offsets = [5, 0], sizes = [10, 256], strides = [1, 1]} : vector<16x256xf32> to vector<10x256xf32>
    %cst_8 = arith.constant dense<0xFF800000> : vector<256xf32>
    %31 = vector.multi_reduction <maximumf>, %30, %cst_8 [0] : vector<10x256xf32> to vector<256xf32>
    %32 = vector.shape_cast %31 : vector<256xf32> to vector<1x256xf32>
    %33 = vector.broadcast %32 : vector<1x256xf32> to vector<10x256xf32>
    %34 = arith.subf %30, %33 : vector<10x256xf32>
    %35 = math.exp %34 : vector<10x256xf32>
    %cst_9 = arith.constant dense<0.000000e+00> : vector<256xf32>
    %36 = vector.multi_reduction <add>, %35, %cst_9 [0] : vector<10x256xf32> to vector<256xf32>
    %37 = vector.shape_cast %36 : vector<256xf32> to vector<1x256xf32>
    %38 = math.log %37 : vector<1x256xf32>
    %39 = arith.addf %38, %32 : vector<1x256xf32>
    %40 = vector.extract_strided_slice %4 {offsets = [5, 0], sizes = [10, 256], strides = [1, 1]} : vector<16x256xf32> to vector<10x256xf32>
    %41 = vector.broadcast %39 : vector<1x256xf32> to vector<10x256xf32>
    %42 = arith.subf %30, %41 : vector<10x256xf32>
    %43 = arith.mulf %40, %42 : vector<10x256xf32>
    %cst_10 = arith.constant dense<0.000000e+00> : vector<256xf32>
    %44 = vector.multi_reduction <add>, %43, %cst_10 [0] : vector<10x256xf32> to vector<256xf32>
    %45 = vector.shape_cast %44 : vector<256xf32> to vector<1x256xf32>
    %cst_11 = arith.constant 0.000000e+00 : f32
    %46 = vector.broadcast %cst_11 : f32 to vector<1x256xf32>
    %47 = arith.subf %46, %45 : vector<1x256xf32>
    %c0_12 = arith.constant 0 : index
    %c0_13 = arith.constant 0 : index
    %48 = vector.load %arg5[%c0_12, %c0_13] : memref<1x256xf32, #tpu.memory_space<vmem>>, vector<1x256xf32>
    %49 = arith.addf %48, %29 : vector<1x256xf32>
    %c0_14 = arith.constant 0 : index
    %c0_15 = arith.constant 0 : index
    %50 = vector.load %arg5[%c0_14, %c0_15] : memref<1x256xf32, #tpu.memory_space<vmem>>, vector<1x256xf32>
    tpu.vector_store %arg5[%c0_14, %c0_15], %49 {strides = array<i32>} : memref<1x256xf32, #tpu.memory_space<vmem>>, vector<1x256xf32>,
    %c0_16 = arith.constant 0 : index
    %c0_17 = arith.constant 0 : index
    %51 = vector.load %arg6[%c0_16, %c0_17] : memref<1x256xf32, #tpu.memory_space<vmem>>, vector<1x256xf32>
    %52 = arith.mulf %47, %10 : vector<1x256xf32>
    %53 = arith.addf %51, %52 : vector<1x256xf32>
    %c0_18 = arith.constant 0 : index
    %c0_19 = arith.constant 0 : index
    %54 = vector.load %arg6[%c0_18, %c0_19] : memref<1x256xf32, #tpu.memory_space<vmem>>, vector<1x256xf32>
    tpu.vector_store %arg6[%c0_18, %c0_19], %53 {strides = array<i32>} : memref<1x256xf32, #tpu.memory_space<vmem>>, vector<1x256xf32>,
    %c0_20 = arith.constant 0 : index
    %c0_21 = arith.constant 0 : index
    %55 = vector.load %arg7[%c0_20, %c0_21] : memref<1x256xf32, #tpu.memory_space<vmem>>, vector<1x256xf32>
    %56 = arith.addf %55, %10 : vector<1x256xf32>
    %c0_22 = arith.constant 0 : index
    %c0_23 = arith.constant 0 : index
    %57 = vector.load %arg7[%c0_22, %c0_23] : memref<1x256xf32, #tpu.memory_space<vmem>>, vector<1x256xf32>
    tpu.vector_store %arg7[%c0_22, %c0_23], %56 {strides = array<i32>} : memref<1x256xf32, #tpu.memory_space<vmem>>, vector<1x256xf32>,
    %c0_i32_24 = arith.constant 0 : i32
    %58 = arith.cmpi eq, %arg1, %c0_i32_24 : i32
    %59 = arith.extui %58 : i1 to i32
    %c0_i32_25 = arith.constant 0 : i32
    %60 = arith.cmpi ne, %59, %c0_i32_25 : i32
    scf.if %60 {
      %61 = tpu.iota {dimensions = array<i32: 2>} : vector<1x1x128xi32>
      %c0_26 = arith.constant 0 : index
      %c0_27 = arith.constant 0 : index
      %62 = vector.load %arg5[%c0_26, %c0_27] : memref<1x256xf32, #tpu.memory_space<vmem>>, vector<1x256xf32>
      %63 = vector.shape_cast %62 : vector<1x256xf32> to vector<1x1x256xf32>
      %cst_28 = arith.constant dense<0.000000e+00> : vector<1xf32>
      %64 = vector.multi_reduction <add>, %63, %cst_28 [1, 2] : vector<1x1x256xf32> to vector<1xf32>
      %65 = vector.shape_cast %64 : vector<1xf32> to vector<1x1x1xf32>
      %66 = vector.extract %65[0, 0, 0] : f32 from vector<1x1x1xf32>
      %c0_29 = arith.constant 0 : index
      %c0_30 = arith.constant 0 : index
      %67 = vector.load %arg6[%c0_29, %c0_30] : memref<1x256xf32, #tpu.memory_space<vmem>>, vector<1x256xf32>
      %68 = vector.shape_cast %67 : vector<1x256xf32> to vector<1x1x256xf32>
      %cst_31 = arith.constant dense<0.000000e+00> : vector<1xf32>
      %69 = vector.multi_reduction <add>, %68, %cst_31 [1, 2] : vector<1x1x256xf32> to vector<1xf32>
      %70 = vector.shape_cast %69 : vector<1xf32> to vector<1x1x1xf32>
      %71 = vector.extract %70[0, 0, 0] : f32 from vector<1x1x1xf32>
      %c0_32 = arith.constant 0 : index
      %c0_33 = arith.constant 0 : index
      %72 = vector.load %arg7[%c0_32, %c0_33] : memref<1x256xf32, #tpu.memory_space<vmem>>, vector<1x256xf32>
      %73 = vector.shape_cast %72 : vector<1x256xf32> to vector<1x1x256xf32>
      %cst_34 = arith.constant dense<0.000000e+00> : vector<1xf32>
      %74 = vector.multi_reduction <add>, %73, %cst_34 [1, 2] : vector<1x1x256xf32> to vector<1xf32>
      %75 = vector.shape_cast %74 : vector<1xf32> to vector<1x1x1xf32>
      %76 = vector.extract %75[0, 0, 0] : f32 from vector<1x1x1xf32>
      %c0_i32_35 = arith.constant 0 : i32
      %77 = vector.broadcast %c0_i32_35 : i32 to vector<1x1x128xi32>
      %78 = arith.cmpi eq, %61, %77 : vector<1x1x128xi32>
      %c1_i32 = arith.constant 1 : i32
      %79 = vector.broadcast %c1_i32 : i32 to vector<1x1x128xi32>
      %80 = arith.cmpi eq, %61, %79 : vector<1x1x128xi32>
      %c2_i32 = arith.constant 2 : i32
      %81 = vector.broadcast %c2_i32 : i32 to vector<1x1x128xi32>
      %82 = arith.cmpi eq, %61, %81 : vector<1x1x128xi32>
      %cst_36 = arith.constant 0.000000e+00 : f32
      %83 = vector.broadcast %76 : f32 to vector<1x1x128xf32>
      %84 = vector.broadcast %cst_36 : f32 to vector<1x1x128xf32>
      %85 = arith.select %82, %83, %84 : vector<1x1x128xi1>, vector<1x1x128xf32>
      %86 = vector.broadcast %71 : f32 to vector<1x1x128xf32>
      %87 = arith.select %80, %86, %85 : vector<1x1x128xi1>, vector<1x1x128xf32>
      %88 = vector.broadcast %66 : f32 to vector<1x1x128xf32>
      %89 = arith.select %78, %88, %87 : vector<1x1x128xi1>, vector<1x1x128xf32>
      %c0_37 = arith.constant 0 : index
      %c0_38 = arith.constant 0 : index
      %c0_39 = arith.constant 0 : index
      %90 = vector.load %arg4[%c0_37, %c0_38, %c0_39] : memref<1x1x128xf32, #tpu.memory_space<vmem>>, vector<1x1x128xf32>
      tpu.vector_store %arg4[%c0_37, %c0_38, %c0_39], %89 {strides = array<i32>} : memref<1x1x128xf32, #tpu.memory_space<vmem>>, vector<1x1x128xf32>,
    } else {
    }
    return
  }
  func.func @transform_0(%arg0: i32, %arg1: i32) -> (i32, i32) {
    %c1_i32 = arith.constant 1 : i32
    %0 = arith.muli %arg0, %c1_i32 : i32
    %1 = arith.addi %0, %arg1 : i32
    %c0_i32 = arith.constant 0 : i32
    %c0_i32_0 = arith.constant 0 : i32
    return %c0_i32, %1 : i32, i32
  }
  func.func @transform_1(%arg0: i32, %arg1: i32) -> (i32, i32) {
    %c1_i32 = arith.constant 1 : i32
    %0 = arith.muli %arg0, %c1_i32 : i32
    %1 = arith.addi %0, %arg1 : i32
    %c0_i32 = arith.constant 0 : i32
    %c0_i32_0 = arith.constant 0 : i32
    return %c0_i32, %1 : i32, i32
  }
  func.func @transform_2(%arg0: i32, %arg1: i32) -> (i32, i32, i32) {
    %c0_i32 = arith.constant 0 : i32
    %c0_i32_0 = arith.constant 0 : i32
    %c0_i32_1 = arith.constant 0 : i32
    return %arg0, %c0_i32, %c0_i32_0 : i32, i32, i32
  }
}

</mosaic_0001>

<llo_original>
// kernel: tpu_custom_call.1
$region0: #{tpu_custom_call.1}
  #allocation0 [shape = 'u32[]', space=smem, size = 0x4, offset = 0x4, fixed_abs, tag = 'smem constant byte address 0x4 - core index']
  #allocation1 [shape = 'u32[144,128]{1,0:T(1,128)}', space=vmem, size = 0x12000, scoped, tag = 'internal scratch']
  #allocation2 [shape = 'f32[1,256]{1,0:T(1,128)}', space=vmem, size = 0x400, scoped, tag = 'scratch operand']
  #allocation3 [shape = 'f32[1,256]{1,0:T(1,128)}', space=vmem, size = 0x400, scoped, tag = 'scratch operand']
  #allocation4 [shape = 'f32[1,256]{1,0:T(1,128)}', space=vmem, size = 0x400, scoped, tag = 'scratch operand']
  %s0 = inlined_call_operand.hbm [shape: f32[16,256], index: 0, kind: input, shape index: {}]
  %s1 = inlined_call_operand.hbm [shape: f32[16,256], index: 1, kind: input, shape index: {}]
  %s2 = inlined_call_operand.hbm [shape: f32[1,1,128], index: 2, kind: output, shape index: {}]
  %s3 = sld [smem:[#allocation0]]
  $region34: #{tpu_custom_call.1} parent=0
    _
  %s5 = ssub.s32 1, %s3
  %s6 = scalar_select 0, %s5, %s3
  $region1: #{tpu_custom_call.1} parent=0
    #allocation5 [shape = 'u8[16384]{0}', space=vmem, size = 0x4000, scoped, tag = 'input window, operand 0, single buffered']
    #allocation6 [shape = 's32[1]{0}', space=sflag, size = 0x4, scoped, tag = 'scoped memory for tpu_custom_call.1']
    #allocation7 [shape = 's32[1]{0}', space=sflag, size = 0x4, scoped, tag = 'scoped memory for tpu_custom_call.1']
    #allocation8 [shape = 'u8[16384]{0}', space=vmem, size = 0x4000, scoped, tag = 'input window, operand 1, single buffered']
    #allocation9 [shape = 's32[1]{0}', space=sflag, size = 0x4, scoped, tag = 'scoped memory for tpu_custom_call.1']
    #allocation10 [shape = 'u8[512]{0}', space=vmem, size = 0x400, scoped, tag = 'output window, operand 0, single buffered']
    %7 = vsyncpa [#allocation6], 0
    %8 = vsyncpa [#allocation9], 0
    %9 = vsyncpa [#allocation7], 0
    // Predicated region
    $region2: #{tpu_custom_call.1} parent=1 // pred_check
      _
    $region3: #{tpu_custom_call.1} parent=1 // pred_check_branch
      %11 = sbr.rel (0) target = $region5
    $region4: #{tpu_custom_call.1} parent=1 // pred_region
      %s12 = sadd.s32 0, 0
      %s13 = smul.u32 2, %s12
      %s15 = ssub.s32 512, 512
      %16 = vsyncadd [#allocation6], %s15
      %s17 = smul.addr %s13, 128
      %s18 = scalar_lea.hbm %s0, %s17
      %s19 = sshll.u32 [#allocation5], 4
      %s20 = int_to_ptr.vmem [resolvable:$true] %s19
      %25 = dma.hbm_to_vmem [thread:$0]  %s18, 512, %s20, [#allocation6], 256, 256, 16
    $region5: #{tpu_custom_call.1} parent=1 // pred_fallthru
      _
    // Predicated region
    $region6: #{tpu_custom_call.1} parent=1 // pred_check
      _
    $region7: #{tpu_custom_call.1} parent=1 // pred_check_branch
      %27 = sbr.rel (0) target = $region9
    $region8: #{tpu_custom_call.1} parent=1 // pred_region
      %s28 = sadd.s32 0, 0
      %s29 = smul.u32 2, %s28
      %s31 = ssub.s32 512, 512
      %32 = vsyncadd [#allocation9], %s31
      %s33 = smul.addr %s29, 128
      %s34 = scalar_lea.hbm %s1, %s33
      %s35 = sshll.u32 [#allocation8], 4
      %s36 = int_to_ptr.vmem [resolvable:$true] %s35
      %41 = dma.hbm_to_vmem [thread:$0]  %s34, 512, %s36, [#allocation9], 256, 256, 16
    $region9: #{tpu_custom_call.1} parent=1 // pred_fallthru
      _
    // Predicated region
    $region10: #{tpu_custom_call.1} parent=1 // pred_check
      _
    $region11: #{tpu_custom_call.1} parent=1 // pred_check_branch
      %43 = sbr.rel (0) target = $region13
    $region12: #{tpu_custom_call.1} parent=1 // pred_region
      %44 = dma.done [#allocation6], 512
    $region13: #{tpu_custom_call.1} parent=1 // pred_fallthru
      _
    // Predicated region
    $region14: #{tpu_custom_call.1} parent=1 // pred_check
      _
    $region15: #{tpu_custom_call.1} parent=1 // pred_check_branch
      %46 = sbr.rel (0) target = $region17
    $region16: #{tpu_custom_call.1} parent=1 // pred_region
      %47 = dma.done [#allocation9], 512
    $region17: #{tpu_custom_call.1} parent=1 // pred_fallthru
      _
    %s48 = sadd.s32 0, 0
    %s49 = smul.u32 2, %s48
    %s50 = sadd.s32 0, 0
    %s51 = smul.u32 2, %s50
    %p52 = scmp.eq.s32.totalorder 0, 0
    // Predicated region
    $region18: #{tpu_custom_call.1} parent=1 // pred_check
      %p53 = pneg %p52
    $region19: #{tpu_custom_call.1} parent=1 // pred_check_branch
      %55 = sbr.rel (%p53) target = $region21
    $region20: #{tpu_custom_call.1} parent=1 // pred_region
      %v56 = vlaneseq
      %vm57 = vcmp.ge.s32.totalorder %v56, 0
      %vm58 = vcmp.lt.s32.totalorder %v56, 256
      %vm59 = vmand %vm57, %vm58
      %60 = vst.msk [vmem:[#allocation2] sm:$0x3] %vm59, 0.0
      %61 = vst.msk [vmem:[#allocation3] sm:$0x3] %vm59, 0.0
      %62 = vst.msk [vmem:[#allocation4] sm:$0x3] %vm59, 0.0
    $region21: #{tpu_custom_call.1} parent=1 // pred_fallthru
      _
    %v63 = vld [vmem:[#allocation5] sm:$0xff]
    %v64 = vld [vmem:[#allocation5 + $0x8] sm:$0xff]
    %v65 = vld [vmem:[#allocation5 + $0x10] sm:$0xff]
    %v66 = vld [vmem:[#allocation5 + $0x18] sm:$0xff]
    %v67 = vld [vmem:[#allocation8] sm:$0xff]
    %v68 = vld [vmem:[#allocation8 + $0x8] sm:$0xff]
    %v69 = vld [vmem:[#allocation8 + $0x10] sm:$0xff]
    %v70 = vld [vmem:[#allocation8 + $0x18] sm:$0xff]
    %vm71 = vcmp.gt.f32.partialorder %v67, 0.0
    %vm72 = vcmp.gt.f32.partialorder %v68, 0.0
    %v73 = vsel %vm71, 1, 0
    %v74 = vsel %vm72, 1, 0
    %v75 = vcvt.s32.f32 %v73
    %v76 = vcvt.s32.f32 %v74
    %v77 = vsub.f32 1.0, %v75
    %v78 = vsub.f32 1.0, %v76
    %v79 = vsub.f32 %v67, %v63
    %v80 = vsub.f32 %v68, %v64
    %v81 = vmul.f32 %v79, %v79
    %v82 = vmul.f32 %v80, %v80
    %vm83 = vcmask 1043456
    %v84 = vsel %vm83, %v81, 0.0
    %v85 = vrot.slane %v84, 4
    %v86 = vadd.f32 %v84, %v85
    %v87 = vrot.slane %v86, 2
    %v88 = vadd.f32 %v86, %v87
    %v89 = vrot.slane %v88, 1
    %v90 = vadd.f32 %v88, %v89
    %v91 = vsel %vm83, %v82, 0.0
    %v92 = vrot.slane %v91, 4
    %v93 = vadd.f32 %v91, %v92
    %v94 = vrot.slane %v93, 2
    %v95 = vadd.f32 %v93, %v94
    %v96 = vrot.slane %v95, 1
    %v97 = vadd.f32 %v95, %v96
    %v98 = vmul.f32 %v90, 5.0
    %v99 = vmul.f32 %v97, 5.0
    %v100 = vadd.f32 %v98, %v81
    %v101 = vadd.f32 %v99, %v82
    %v102 = vmul.f32 %v100, %v75
    %v103 = vmul.f32 %v101, %v76
    %v104 = vmul.f32 %v63, %v63
    %v105 = vmul.f32 %v64, %v64
    %v106 = vmul.f32 %v104, 0.5
    %v107 = vmul.f32 %v105, 0.5
    %v108 = vmul.f32 %v106, %v77
    %v109 = vmul.f32 %v107, %v78
    %v110 = vadd.f32 %v102, %v108
    %v111 = vadd.f32 %v103, %v109
    %vm112 = vcmask 1047557
    %v113 = vsel %vm112, %v63, -inf
    %vm114 = vcmask 1046528
    %v115 = vsel %vm114, %v65, -inf
    %v116 = vmax.f32 %v113, %v115
    %v117 = vrot.slane %v116, 4
    %v118 = vmax.f32 %v116, %v117
    %v119 = vrot.slane %v118, 2
    %v120 = vmax.f32 %v118, %v119
    %v121 = vrot.slane %v120, 1
    %v122 = vmax.f32 %v120, %v121
    %v123 = vsel %vm112, %v64, -inf
    %v124 = vsel %vm114, %v66, -inf
    %v125 = vmax.f32 %v123, %v124
    %v126 = vrot.slane %v125, 4
    %v127 = vmax.f32 %v125, %v126
    %v128 = vrot.slane %v127, 2
    %v129 = vmax.f32 %v127, %v128
    %v130 = vrot.slane %v129, 1
    %v131 = vmax.f32 %v129, %v130
    %v132 = vsub.f32 %v63, %v122
    %v133 = vsub.f32 %v64, %v131
    %v134 = vsub.f32 %v65, %v122
    %v135 = vsub.f32 %v66, %v131
    %v136 = vmul.f32 %v132, 1.442695
    %v137 = vpow.pop %v136
    %v138 = vmul.f32 %v133, 1.442695
    %v139 = vpow.pop %v138
    %v140 = vmul.f32 %v134, 1.442695
    %v141 = vpow.pop %v140
    %v142 = vmul.f32 %v135, 1.442695
    %v143 = vpow.pop %v142
    %vm148 = vcmask 1042432
    %v149 = vrot.slane %v137, 5
    %v150 = vrot.slane %v141, 5
    %v151 = vsel %vm148, %v149, %v150
    %v152 = vrot.slane %v139, 5
    %v153 = vrot.slane %v143, 5
    %v154 = vsel %vm148, %v152, %v153
    %vm159 = vcmask 1041408
    %v160 = vsel %vm159, %v150, 0.0
    %v161 = vadd.f32 %v151, %v160
    %v162 = vrot.slane %v161, 4
    %v163 = vadd.f32 %v161, %v162
    %v164 = vrot.slane %v163, 2
    %v165 = vadd.f32 %v163, %v164
    %v166 = vrot.slane %v165, 1
    %v167 = vadd.f32 %v165, %v166
    %v168 = vsel %vm159, %v153, 0.0
    %v169 = vadd.f32 %v154, %v168
    %v170 = vrot.slane %v169, 4
    %v171 = vadd.f32 %v169, %v170
    %v172 = vrot.slane %v171, 2
    %v173 = vadd.f32 %v171, %v172
    %v174 = vrot.slane %v173, 1
    %v175 = vadd.f32 %v173, %v174
    %v176 = vlog2.pop %v167
    %v177 = vmul.f32 %v176, 0.6931472
    %v178 = vlog2.pop %v175
    %v179 = vmul.f32 %v178, 0.6931472
    %v180 = vadd.f32 %v177, %v122
    %v181 = vadd.f32 %v179, %v131
    %v182 = vsub.f32 %v63, %v180
    %v183 = vsub.f32 %v64, %v181
    %v184 = vsub.f32 %v65, %v180
    %v185 = vsub.f32 %v66, %v181
    %v186 = vmul.f32 %v67, %v182
    %v187 = vmul.f32 %v68, %v183
    %v188 = vmul.f32 %v69, %v184
    %v189 = vmul.f32 %v70, %v185
    %v194 = vrot.slane %v186, 5
    %v195 = vrot.slane %v188, 5
    %v196 = vsel %vm148, %v194, %v195
    %v197 = vrot.slane %v187, 5
    %v198 = vrot.slane %v189, 5
    %v199 = vsel %vm148, %v197, %v198
    %v204 = vsel %vm159, %v195, 0.0
    %v205 = vadd.f32 %v196, %v204
    %v206 = vrot.slane %v205, 4
    %v207 = vadd.f32 %v205, %v206
    %v208 = vrot.slane %v207, 2
    %v209 = vadd.f32 %v207, %v208
    %v210 = vrot.slane %v209, 1
    %v211 = vadd.f32 %v209, %v210
    %v212 = vsel %vm159, %v198, 0.0
    %v213 = vadd.f32 %v199, %v212
    %v214 = vrot.slane %v213, 4
    %v215 = vadd.f32 %v213, %v214
    %v216 = vrot.slane %v215, 2
    %v217 = vadd.f32 %v215, %v216
    %v218 = vrot.slane %v217, 1
    %v219 = vadd.f32 %v217, %v218
    %v220 = vsub.f32 0.0, %v211
    %v221 = vsub.f32 0.0, %v219
    %v222 = vld [vmem:[#allocation2] sm:$0x3]
    %v225 = vcombine.high %v110, %v111
    %v227 = vunpack.c.l.s4 1966171168
    %v228 = vunpack.c.0.s8 %v227
    %v229 = vlaneseq
    %v230 = vshrl.u32 %v229, 7
    %v231 = vsub.s32 %v228, %v230
    %v232 = vrot.slane %v225, %v231
    %v234 = vunpack.c.l.s4 1966171168
    %v235 = vunpack.c.0.s8 %v234
    %v236 = vlaneseq
    %v237 = vshrl.u32 %v236, 7
    %v238 = vsub.s32 %v235, %v237
    %v239 = vrot.slane %v232, %v238
    %v241 = vadd.f32 %v222, %v239
    %v242 = vlaneseq
    %vm243 = vcmp.ge.s32.totalorder %v242, 0
    %vm244 = vcmp.lt.s32.totalorder %v242, 256
    %vm245 = vmand %vm243, %vm244
    %246 = vst.msk [vmem:[#allocation2] sm:$0x3] %vm245, %v241
    %v247 = vld [vmem:[#allocation3] sm:$0x3]
    %v248 = vmul.f32 %v220, %v75
    %v249 = vmul.f32 %v221, %v76
    %v252 = vcombine.high %v248, %v249
    %v254 = vunpack.c.l.s4 1966171168
    %v255 = vunpack.c.0.s8 %v254
    %v256 = vlaneseq
    %v257 = vshrl.u32 %v256, 7
    %v258 = vsub.s32 %v255, %v257
    %v259 = vrot.slane %v252, %v258
    %v261 = vunpack.c.l.s4 1966171168
    %v262 = vunpack.c.0.s8 %v261
    %v263 = vlaneseq
    %v264 = vshrl.u32 %v263, 7
    %v265 = vsub.s32 %v262, %v264
    %v266 = vrot.slane %v259, %v265
    %v268 = vadd.f32 %v247, %v266
    %269 = vst.msk [vmem:[#allocation3] sm:$0x3] %vm245, %v268
    %v270 = vld [vmem:[#allocation4] sm:$0x3]
    %v273 = vcombine.high %v75, %v76
    %v275 = vunpack.c.l.s4 1966171168
    %v276 = vunpack.c.0.s8 %v275
    %v277 = vlaneseq
    %v278 = vshrl.u32 %v277, 7
    %v279 = vsub.s32 %v276, %v278
    %v280 = vrot.slane %v273, %v279
    %v282 = vunpack.c.l.s4 1966171168
    %v283 = vunpack.c.0.s8 %v282
    %v284 = vlaneseq
    %v285 = vshrl.u32 %v284, 7
    %v286 = vsub.s32 %v283, %v285
    %v287 = vrot.slane %v280, %v286
    %v289 = vadd.f32 %v270, %v287
    %290 = vst.msk [vmem:[#allocation4] sm:$0x3] %vm245, %v289
    // Predicated region
    $region22: #{tpu_custom_call.1} parent=1 // pred_check
      %p291 = pneg %p52
    $region23: #{tpu_custom_call.1} parent=1 // pred_check_branch
      %293 = sbr.rel (%p291) target = $region25
    $region24: #{tpu_custom_call.1} parent=1 // pred_region
      %v294 = vlaneseq
      %v295 = vand.u32 %v294, 127
      %v296 = vld [vmem:[#allocation2] sm:$0x3]
      %v298 = vlaneseq
      %v299 = vshrl.u32 %v298, 7
      %v300 = vsub.s32 0, %v299
      %v301 = vrot.slane %v296, %v300
      %v302 = vlaneseq
      %v303 = vshrl.u32 %v302, 7
      %v304 = vsub.s32 1, %v303
      %v305 = vrot.slane %v296, %v304
      %vm308 = vcmask 1040384
      %v309 = vsel %vm308, %v301, 0.0
      %v310 = vsel %vm308, %v305, 0.0
      %v311 = vadd.f32 %v309, %v310
      %312 = vadd.xlane.f32.xlu0 %v311
      %v313 = vpop.xlane.xlu0 %312
      %v314 = vrot.slane %v313, 4
      %v315 = vadd.f32 %v313, %v314
      %v316 = vrot.slane %v315, 2
      %v317 = vadd.f32 %v315, %v316
      %v318 = vrot.slane %v317, 1
      %v319 = vadd.f32 %v317, %v318
      %s320 = vtos %v319
      %v321 = vld [vmem:[#allocation3] sm:$0x3]
      %v323 = vlaneseq
      %v324 = vshrl.u32 %v323, 7
      %v325 = vsub.s32 0, %v324
      %v326 = vrot.slane %v321, %v325
      %v327 = vlaneseq
      %v328 = vshrl.u32 %v327, 7
      %v329 = vsub.s32 1, %v328
      %v330 = vrot.slane %v321, %v329
      %v333 = vsel %vm308, %v326, 0.0
      %v334 = vsel %vm308, %v330, 0.0
      %v335 = vadd.f32 %v333, %v334
      %336 = vadd.xlane.f32.xlu0 %v335
      %v337 = vpop.xlane.xlu0 %336
      %v338 = vrot.slane %v337, 4
      %v339 = vadd.f32 %v337, %v338
      %v340 = vrot.slane %v339, 2
      %v341 = vadd.f32 %v339, %v340
      %v342 = vrot.slane %v341, 1
      %v343 = vadd.f32 %v341, %v342
      %s344 = vtos %v343
      %v345 = vld [vmem:[#allocation4] sm:$0x3]
      %v347 = vlaneseq
      %v348 = vshrl.u32 %v347, 7
      %v349 = vsub.s32 0, %v348
      %v350 = vrot.slane %v345, %v349
      %v351 = vlaneseq
      %v352 = vshrl.u32 %v351, 7
      %v353 = vsub.s32 1, %v352
      %v354 = vrot.slane %v345, %v353
      %v357 = vsel %vm308, %v350, 0.0
      %v358 = vsel %vm308, %v354, 0.0
      %v359 = vadd.f32 %v357, %v358
      %360 = vadd.xlane.f32.xlu0 %v359
      %v361 = vpop.xlane.xlu0 %360
      %v362 = vrot.slane %v361, 4
      %v363 = vadd.f32 %v361, %v362
      %v364 = vrot.slane %v363, 2
      %v365 = vadd.f32 %v363, %v364
      %v366 = vrot.slane %v365, 1
      %v367 = vadd.f32 %v365, %v366
      %s368 = vtos %v367
      %vm369 = vcmp.eq.s32.totalorder %v295, 0
      %vm370 = vcmp.eq.s32.totalorder %v295, 1
      %vm371 = vcmp.eq.s32.totalorder %v295, 2
      %v372 = vstv %s368
      %v373 = vsel %vm371, %v372, 0.0
      %v374 = vstv %s344
      %v375 = vsel %vm370, %v374, %v373
      %v376 = vstv %s320
      %v377 = vsel %vm369, %v376, %v375
      %378 = vst [vmem:[#allocation10] sm:$0x1] %v377
    $region25: #{tpu_custom_call.1} parent=1 // pred_fallthru
      _
    // Predicated region
    $region26: #{tpu_custom_call.1} parent=1 // pred_check
      _
    $region27: #{tpu_custom_call.1} parent=1 // pred_check_branch
      %380 = sbr.rel (0) target = $region29
    $region28: #{tpu_custom_call.1} parent=1 // pred_region
      %s382 = ssub.s32 16, 16
      %383 = vsyncadd [#allocation7], %s382
      %s385 = sshll.u32 [#allocation10], 4
      %s386 = int_to_ptr.vmem [resolvable:$true] %s385
      %388 = dma.vmem_to_hbm [thread:$0]  %s386, 16, %s2, [#allocation7]
    $region29: #{tpu_custom_call.1} parent=1 // pred_fallthru
      _
    // Predicated region
    $region30: #{tpu_custom_call.1} parent=1 // pred_check
      _
    $region31: #{tpu_custom_call.1} parent=1 // pred_check_branch
      %390 = sbr.rel (0) target = $region33
    $region32: #{tpu_custom_call.1} parent=1 // pred_region
      %391 = dma.done [#allocation7], 16
    $region33: #{tpu_custom_call.1} parent=1 // pred_fallthru
      _
    %392 = vsyncpa [#allocation6], 1
    %393 = vsyncpa [#allocation9], 1
    %394 = vsyncpa [#allocation7], 1

</llo_original>
